<compile_context>
chip_gen: v7x
topology: tpu7x:2x2x1
jax: 0.10.0
libtpu: 0.0.40
codegen_flags: <defaults>
</compile_context>

<pallas_src>
import functools

import jax
import jax.numpy as jnp
from jax.experimental import pallas as pl
from jax.experimental.pallas import tpu as pltpu


def _round_up(x, m):
    return ((x + m - 1) // m) * m


def _lstm_embed_kernel(g_ref, whh_ref, wfc_ref, bfc_ref, out_ref, h_sc, *,
                       seq_len, batch_tile, hidden):
    """Serial LSTM recurrence on one batch tile + one batched FC matmul.

    g_ref   : (T*BT, 4H) f32   precomputed  embed@W_ih^T + b  rows (time-major)
    whh_ref : (4H, 4H)   bf16  W_hh^T zero-padded on the contraction dim
    wfc_ref : (4H, Cp)   bf16  W_fc^T zero-padded (rows >= H) and lane-padded
    bfc_ref : (1, Cp)    f32
    out_ref : (T*BT, Cp) f32
    h_sc    : (T*BT, 4H) f32   stacked full-lane h state (valid lanes [0:H])
    """
    T, BT, H = seq_len, batch_tile, hidden
    G4 = 4 * H

    whh = whh_ref[...]                                     # hoisted, bf16

    def step(t, carry):
        h4, c4 = carry                                     # (BT, 4H) f32, valid lanes [0:H]
        row = pl.multiple_of(t * BT, BT)
        # Recurrent matmul: bf16 operands, f32 accumulate.  Zero rows of whh
        # kill the garbage lanes [H:4H] of h4.
        gates = g_ref[pl.ds(row, BT), :] + jnp.dot(
            h4.astype(jnp.bfloat16), whh,
            preferred_element_type=jnp.float32)            # (BT, 4H) f32
        # Full-vreg transcendentals: 2 EUP pushes instead of 4 sliced ones.
        sg = jax.nn.sigmoid(gates)                         # [ i | f | . | o ]
        th = jnp.tanh(gates)                               # [ . | . | g | . ]
        # Align f/g/o onto lanes [0:H] with XLU rolls (separate issue slot).
        f_al = pltpu.roll(sg, 3 * H, axis=1)
        g_al = pltpu.roll(th, 2 * H, axis=1)
        o_al = pltpu.roll(sg, 1 * H, axis=1)
        c4n = f_al * c4 + sg * g_al                        # valid at lanes [0:H]
        h4n = o_al * jnp.tanh(c4n)                         # valid at lanes [0:H]
        h_sc[pl.ds(row, BT), :] = h4n                      # full (8,128) unmasked store
        return h4n, c4n

    h0 = jnp.zeros((BT, G4), jnp.float32)
    c0 = jnp.zeros((BT, G4), jnp.float32)
    unroll = True if T <= 32 else 8                        # gate the unroll
    jax.lax.fori_loop(0, T, step, (h0, c0), unroll=unroll)

    # One batched FC over all (t, b) rows; zero rows of wfc drop garbage lanes.
    out_ref[...] = (jnp.dot(h_sc[...].astype(jnp.bfloat16), wfc_ref[...],
                            preferred_element_type=jnp.float32)
                    + bfc_ref[...]).astype(out_ref.dtype)


def rnn_lstm_embed_forward(x_tokens, params):
    """x_tokens: (B, T) int32 token ids.  Returns (B, T, num_classes) float32."""
    embed_w = params["embed_w"].astype(jnp.float32)   # (C, E)
    w_ih = params["w_ih"].astype(jnp.float32)         # (4H, E)
    w_hh = params["w_hh"].astype(jnp.float32)         # (4H, H)
    b_ih = params["b_ih"].astype(jnp.float32)         # (4H,)
    b_hh = params["b_hh"].astype(jnp.float32)         # (4H,)
    w_fc = params["w_fc"].astype(jnp.float32)         # (C, H)
    b_fc = params["b_fc"].astype(jnp.float32)         # (C,)

    B, T = x_tokens.shape
    H = w_hh.shape[1]
    C = w_fc.shape[0]
    G4 = 4 * H

    BT = 8                            # f32 sublane tile -> per-grid-point batch tile
    Bp = _round_up(B, BT)
    nbt = Bp // BT
    Cp = _round_up(C, 128)            # lane tile -> lane-dense output stores

    # ---- Fold embedding + input projection + biases into ONE lookup table.
    #      G_table[tok] = embed_w[tok] @ W_ih^T + (b_ih + b_hh)    (C, 4H)
    g_table = embed_w @ w_ih.T + (b_ih + b_hh)[None, :]

    # Tokens -> (batch-tile, time, within-tile-batch) layout; gather the table
    # rows in the wrapper (JAX glue) so the kernel never sees E at all.
    tok = jnp.pad(x_tokens.astype(jnp.int32), ((0, Bp - B), (0, 0)))    # (Bp, T)
    tok = tok.reshape(nbt, BT, T).transpose(0, 2, 1)                    # (nbt, T, BT)
    g_all = jnp.take(g_table, tok.reshape(-1), axis=0)                  # (nbt*T*BT, 4H)
    g_all = g_all.reshape(nbt * T * BT, G4).astype(jnp.float32)

    # Recurrent weight: W_hh^T zero-padded on the contraction dim to 4H so the
    # in-kernel h state stays a full-lane (BT, 4H) vreg (no lane slicing).
    w_hh_pad = jnp.zeros((G4, G4), jnp.float32).at[:H, :].set(w_hh.T)
    w_hh_pad = w_hh_pad.astype(jnp.bfloat16)                            # MXU bf16
    # FC weight: same zero-padded contraction dim + lane-padded class dim.
    w_fc_pad = jnp.zeros((G4, Cp), jnp.float32).at[:H, :C].set(w_fc.T)
    w_fc_pad = w_fc_pad.astype(jnp.bfloat16)                            # MXU bf16
    b_fc_pad = jnp.zeros((1, Cp), jnp.float32).at[0, :C].set(b_fc)

    kernel = functools.partial(_lstm_embed_kernel,
                               seq_len=T, batch_tile=BT, hidden=H)

    grid_spec = pltpu.PrefetchScalarGridSpec(
        num_scalar_prefetch=0,
        grid=(nbt,),
        in_specs=[
            pl.BlockSpec((T * BT, G4), lambda i: (i, 0)),   # gathered gate rows
            pl.BlockSpec((G4, G4), lambda i: (0, 0)),       # W_hh^T (padded, bf16)
            pl.BlockSpec((G4, Cp), lambda i: (0, 0)),       # W_fc^T (padded, bf16)
            pl.BlockSpec((1, Cp), lambda i: (0, 0)),        # b_fc   (lane-padded)
        ],
        out_specs=pl.BlockSpec((T * BT, Cp), lambda i: (i, 0)),
        scratch_shapes=[
            pltpu.VMEM((T * BT, G4), jnp.float32),          # stacked h state
        ],
    )

    # Advisory cost estimate so XLA schedules surrounding glue ops sensibly.
    flops = nbt * (2 * T * BT * G4 * G4 + 2 * T * BT * G4 * Cp)
    transcendentals = nbt * T * 3 * BT * G4
    bytes_accessed = (g_all.size * 4 + w_hh_pad.size * 2 + w_fc_pad.size * 2
                      + b_fc_pad.size * 4 + nbt * T * BT * Cp * 4)
    cost = pl.CostEstimate(flops=flops, transcendentals=transcendentals,
                           bytes_accessed=bytes_accessed)

    out = pl.pallas_call(
        kernel,
        out_shape=jax.ShapeDtypeStruct((nbt * T * BT, Cp), jnp.float32),
        grid_spec=grid_spec,
        compiler_params=pltpu.CompilerParams(
            dimension_semantics=("parallel",)),             # v7x: 2 TCs split batch tiles
        cost_estimate=cost,
    )(g_all, w_hh_pad, w_fc_pad, b_fc_pad)

    # Drop batch/class padding; back to PyTorch's (B, T, C) layout (tiny arrays).
    out = out.reshape(nbt, T, BT, Cp).transpose(0, 2, 1, 3)             # (nbt, BT, T, Cp)
    out = out.reshape(Bp, T, Cp)[:B, :, :C]
    return out


def init_params(key, embed_size, hidden_size, num_classes):
    """Deterministic parameter init mirroring the module's shapes."""
    ks = jax.random.split(key, 7)
    H, E, C = hidden_size, embed_size, num_classes
    bound = 1.0 / jnp.sqrt(H)
    u = lambda k, shape, b: jax.random.uniform(k, shape, jnp.float32, -b, b)
    return {
        "embed_w": u(ks[0], (C, E), 0.1),          # embed.weight ~ U(-0.1, 0.1)
        "w_ih": u(ks[1], (4 * H, E), bound),       # LSTMCell weight_ih
        "w_hh": u(ks[2], (4 * H, H), bound),       # LSTMCell weight_hh
        "b_ih": u(ks[3], (4 * H,), bound),
        "b_hh": u(ks[4], (4 * H,), bound),
        "w_fc": u(ks[5], (C, H), bound),           # fc.weight
        "b_fc": u(ks[6], (C,), bound),             # fc.bias
    }


if __name__ == "__main__":
    # Small shapes consistent with the module's forward.
    batch, seq = 2, 8
    input_size = 32          # unused by forward (matches PyTorch module)
    embed_size = 32
    hidden_size = 32
    num_classes = 16

    key = jax.random.PRNGKey(0)
    k_param, k_x = jax.random.split(key)
    params = init_params(k_param, embed_size, hidden_size, num_classes)
    x_tokens = jax.random.randint(k_x, (batch, seq), 0, num_classes, jnp.int32)

    out = rnn_lstm_embed_forward(x_tokens, params)
    out = jax.block_until_ready(out)
    assert out.shape == (batch, seq, num_classes)

    # Pure-JAX f32 reference of embedding + LSTM recurrence + FC.
    def ref_forward(x_tokens, p):
        H = hidden_size
        xe = jnp.take(p["embed_w"], x_tokens.reshape(-1), axis=0).reshape(
            batch, seq, embed_size)
        h = jnp.zeros((batch, H), jnp.float32)
        c = jnp.zeros((batch, H), jnp.float32)
        outs = []
        for t in range(seq):
            g = xe[:, t] @ p["w_ih"].T + p["b_ih"] + h @ p["w_hh"].T + p["b_hh"]
            i = jax.nn.sigmoid(g[:, 0*H:1*H]); f = jax.nn.sigmoid(g[:, 1*H:2*H])
            gg = jnp.tanh(g[:, 2*H:3*H]);      o = jax.nn.sigmoid(g[:, 3*H:4*H])
            c = f * c + i * gg
            h = o * jnp.tanh(c)
            outs.append(h)
        hs = jnp.stack(outs, 1)
        return hs @ p["w_fc"].T + p["b_fc"]

    ref = ref_forward(x_tokens, params)
    # bf16 MXU operands in the kernel -> relaxed tolerance vs. pure-f32 reference.
    assert jnp.allclose(out, ref, atol=5e-2, rtol=5e-2)

    print("KERNEL_OK")
</pallas_src>

<mosaic_0001>
module attributes {stable_mosaic.version = 11 : i64} {
  func.func @_lstm_embed_kernel(%arg0: i32, %arg1: memref<64x128xf32, #tpu.memory_space<vmem>>, %arg2: memref<128x128xbf16, #tpu.memory_space<vmem>>, %arg3: memref<128x128xbf16, #tpu.memory_space<vmem>>, %arg4: memref<1x128xf32, #tpu.memory_space<vmem>>, %arg5: memref<64x128xf32, #tpu.memory_space<vmem>>, %arg6: memref<64x128xf32, #tpu.memory_space<vmem>>) attributes {dimension_semantics = [#tpu.dimension_semantics<parallel>], iteration_bounds = array<i64: 1>, scalar_prefetch = 0 : i64, scratch_operands = 1 : i64, tpu.core_type = #tpu.core_type<tc>, window_params = [{transform_indices = @transform_0, window_bounds = array<i64: 64, 128>}, {pipeline_mode = #tpu.pipeline_mode<synchronous>, transform_indices = @transform_1, window_bounds = array<i64: 128, 128>}, {pipeline_mode = #tpu.pipeline_mode<synchronous>, transform_indices = @transform_2, window_bounds = array<i64: 128, 128>}, {pipeline_mode = #tpu.pipeline_mode<synchronous>, transform_indices = @transform_3, window_bounds = array<i64: 1, 128>}, {transform_indices = @transform_4, window_bounds = array<i64: 64, 128>}]} {
    %c0 = arith.constant 0 : index
    %c0_0 = arith.constant 0 : index
    %0 = vector.load %arg2[%c0, %c0_0] : memref<128x128xbf16, #tpu.memory_space<vmem>>, vector<128x128xbf16>
    %cst = arith.constant 0.000000e+00 : f32
    %1 = vector.broadcast %cst : f32 to vector<8x128xf32>
    %cst_1 = arith.constant 0.000000e+00 : f32
    %2 = vector.broadcast %cst_1 : f32 to vector<8x128xf32>
    %c0_i32 = arith.constant 0 : i32
    %c8_i32 = arith.constant 8 : i32
    %3 = arith.muli %c0_i32, %c8_i32 : i32
    %4 = tpu.assume_multiple %3, 8 : i32
    %5 = arith.index_cast %4 : i32 to index
    %c0_2 = arith.constant 0 : index
    %6 = vector.load %arg1[%5, %c0_2] : memref<64x128xf32, #tpu.memory_space<vmem>>, vector<8x128xf32>
    %7 = arith.truncf %1 : vector<8x128xf32> to vector<8x128xbf16>
    %cst_3 = arith.constant dense<0.000000e+00> : vector<8x128xf32>
    %8 = tpu.matmul %7, %0, %cst_3 {dimension_numbers = #tpu.dot_dimension_numbers<[1], [0], [0], [1], [0, 0, 1, 1], [], []>} : vector<8x128xbf16>, vector<128x128xbf16>, vector<8x128xf32> -> vector<8x128xf32>
    %9 = arith.addf %6, %8 : vector<8x128xf32>
    %10 = arith.negf %9 : vector<8x128xf32>
    %11 = math.exp %10 : vector<8x128xf32>
    %cst_4 = arith.constant 1.000000e+00 : f32
    %12 = vector.broadcast %cst_4 : f32 to vector<8x128xf32>
    %13 = arith.addf %12, %11 : vector<8x128xf32>
    %14 = arith.divf %12, %13 : vector<8x128xf32>
    %15 = math.tanh %9 : vector<8x128xf32>
    %c96_i32 = arith.constant 96 : i32
    %16 = tpu.dynamic_rotate %14 by %c96_i32 dim 1 : vector<8x128xf32>, i32 -> vector<8x128xf32>
    %c64_i32 = arith.constant 64 : i32
    %17 = tpu.dynamic_rotate %15 by %c64_i32 dim 1 : vector<8x128xf32>, i32 -> vector<8x128xf32>
    %c32_i32 = arith.constant 32 : i32
    %18 = tpu.dynamic_rotate %14 by %c32_i32 dim 1 : vector<8x128xf32>, i32 -> vector<8x128xf32>
    %19 = arith.mulf %16, %2 : vector<8x128xf32>
    %20 = arith.mulf %14, %17 : vector<8x128xf32>
    %21 = arith.addf %19, %20 : vector<8x128xf32>
    %22 = math.tanh %21 : vector<8x128xf32>
    %23 = arith.mulf %18, %22 : vector<8x128xf32>
    %24 = arith.index_cast %4 : i32 to index
    %c0_5 = arith.constant 0 : index
    %25 = vector.load %arg6[%24, %c0_5] : memref<64x128xf32, #tpu.memory_space<vmem>>, vector<8x128xf32>
    tpu.vector_store %arg6[%24, %c0_5], %23 {strides = array<i32>} : memref<64x128xf32, #tpu.memory_space<vmem>>, vector<8x128xf32>,
    %c1_i32 = arith.constant 1 : i32
    %c8_i32_6 = arith.constant 8 : i32
    %26 = arith.muli %c1_i32, %c8_i32_6 : i32
    %27 = tpu.assume_multiple %26, 8 : i32
    %28 = arith.index_cast %27 : i32 to index
    %c0_7 = arith.constant 0 : index
    %29 = vector.load %arg1[%28, %c0_7] : memref<64x128xf32, #tpu.memory_space<vmem>>, vector<8x128xf32>
    %30 = arith.truncf %23 : vector<8x128xf32> to vector<8x128xbf16>
    %cst_8 = arith.constant dense<0.000000e+00> : vector<8x128xf32>
    %31 = tpu.matmul %30, %0, %cst_8 {dimension_numbers = #tpu.dot_dimension_numbers<[1], [0], [0], [1], [0, 0, 1, 1], [], []>} : vector<8x128xbf16>, vector<128x128xbf16>, vector<8x128xf32> -> vector<8x128xf32>
    %32 = arith.addf %29, %31 : vector<8x128xf32>
    %33 = arith.negf %32 : vector<8x128xf32>
    %34 = math.exp %33 : vector<8x128xf32>
    %cst_9 = arith.constant 1.000000e+00 : f32
    %35 = vector.broadcast %cst_9 : f32 to vector<8x128xf32>
    %36 = arith.addf %35, %34 : vector<8x128xf32>
    %37 = arith.divf %35, %36 : vector<8x128xf32>
    %38 = math.tanh %32 : vector<8x128xf32>
    %c96_i32_10 = arith.constant 96 : i32
    %39 = tpu.dynamic_rotate %37 by %c96_i32_10 dim 1 : vector<8x128xf32>, i32 -> vector<8x128xf32>
    %c64_i32_11 = arith.constant 64 : i32
    %40 = tpu.dynamic_rotate %38 by %c64_i32_11 dim 1 : vector<8x128xf32>, i32 -> vector<8x128xf32>
    %c32_i32_12 = arith.constant 32 : i32
    %41 = tpu.dynamic_rotate %37 by %c32_i32_12 dim 1 : vector<8x128xf32>, i32 -> vector<8x128xf32>
    %42 = arith.mulf %39, %21 : vector<8x128xf32>
    %43 = arith.mulf %37, %40 : vector<8x128xf32>
    %44 = arith.addf %42, %43 : vector<8x128xf32>
    %45 = math.tanh %44 : vector<8x128xf32>
    %46 = arith.mulf %41, %45 : vector<8x128xf32>
    %47 = arith.index_cast %27 : i32 to index
    %c0_13 = arith.constant 0 : index
    %48 = vector.load %arg6[%47, %c0_13] : memref<64x128xf32, #tpu.memory_space<vmem>>, vector<8x128xf32>
    tpu.vector_store %arg6[%47, %c0_13], %46 {strides = array<i32>} : memref<64x128xf32, #tpu.memory_space<vmem>>, vector<8x128xf32>,
    %c2_i32 = arith.constant 2 : i32
    %c8_i32_14 = arith.constant 8 : i32
    %49 = arith.muli %c2_i32, %c8_i32_14 : i32
    %50 = tpu.assume_multiple %49, 8 : i32
    %51 = arith.index_cast %50 : i32 to index
    %c0_15 = arith.constant 0 : index
    %52 = vector.load %arg1[%51, %c0_15] : memref<64x128xf32, #tpu.memory_space<vmem>>, vector<8x128xf32>
    %53 = arith.truncf %46 : vector<8x128xf32> to vector<8x128xbf16>
    %cst_16 = arith.constant dense<0.000000e+00> : vector<8x128xf32>
    %54 = tpu.matmul %53, %0, %cst_16 {dimension_numbers = #tpu.dot_dimension_numbers<[1], [0], [0], [1], [0, 0, 1, 1], [], []>} : vector<8x128xbf16>, vector<128x128xbf16>, vector<8x128xf32> -> vector<8x128xf32>
    %55 = arith.addf %52, %54 : vector<8x128xf32>
    %56 = arith.negf %55 : vector<8x128xf32>
    %57 = math.exp %56 : vector<8x128xf32>
    %cst_17 = arith.constant 1.000000e+00 : f32
    %58 = vector.broadcast %cst_17 : f32 to vector<8x128xf32>
    %59 = arith.addf %58, %57 : vector<8x128xf32>
    %60 = arith.divf %58, %59 : vector<8x128xf32>
    %61 = math.tanh %55 : vector<8x128xf32>
    %c96_i32_18 = arith.constant 96 : i32
    %62 = tpu.dynamic_rotate %60 by %c96_i32_18 dim 1 : vector<8x128xf32>, i32 -> vector<8x128xf32>
    %c64_i32_19 = arith.constant 64 : i32
    %63 = tpu.dynamic_rotate %61 by %c64_i32_19 dim 1 : vector<8x128xf32>, i32 -> vector<8x128xf32>
    %c32_i32_20 = arith.constant 32 : i32
    %64 = tpu.dynamic_rotate %60 by %c32_i32_20 dim 1 : vector<8x128xf32>, i32 -> vector<8x128xf32>
    %65 = arith.mulf %62, %44 : vector<8x128xf32>
    %66 = arith.mulf %60, %63 : vector<8x128xf32>
    %67 = arith.addf %65, %66 : vector<8x128xf32>
    %68 = math.tanh %67 : vector<8x128xf32>
    %69 = arith.mulf %64, %68 : vector<8x128xf32>
    %70 = arith.index_cast %50 : i32 to index
    %c0_21 = arith.constant 0 : index
    %71 = vector.load %arg6[%70, %c0_21] : memref<64x128xf32, #tpu.memory_space<vmem>>, vector<8x128xf32>
    tpu.vector_store %arg6[%70, %c0_21], %69 {strides = array<i32>} : memref<64x128xf32, #tpu.memory_space<vmem>>, vector<8x128xf32>,
    %c3_i32 = arith.constant 3 : i32
    %c8_i32_22 = arith.constant 8 : i32
    %72 = arith.muli %c3_i32, %c8_i32_22 : i32
    %73 = tpu.assume_multiple %72, 8 : i32
    %74 = arith.index_cast %73 : i32 to index
    %c0_23 = arith.constant 0 : index
    %75 = vector.load %arg1[%74, %c0_23] : memref<64x128xf32, #tpu.memory_space<vmem>>, vector<8x128xf32>
    %76 = arith.truncf %69 : vector<8x128xf32> to vector<8x128xbf16>
    %cst_24 = arith.constant dense<0.000000e+00> : vector<8x128xf32>
    %77 = tpu.matmul %76, %0, %cst_24 {dimension_numbers = #tpu.dot_dimension_numbers<[1], [0], [0], [1], [0, 0, 1, 1], [], []>} : vector<8x128xbf16>, vector<128x128xbf16>, vector<8x128xf32> -> vector<8x128xf32>
    %78 = arith.addf %75, %77 : vector<8x128xf32>
    %79 = arith.negf %78 : vector<8x128xf32>
    %80 = math.exp %79 : vector<8x128xf32>
    %cst_25 = arith.constant 1.000000e+00 : f32
    %81 = vector.broadcast %cst_25 : f32 to vector<8x128xf32>
    %82 = arith.addf %81, %80 : vector<8x128xf32>
    %83 = arith.divf %81, %82 : vector<8x128xf32>
    %84 = math.tanh %78 : vector<8x128xf32>
    %c96_i32_26 = arith.constant 96 : i32
    %85 = tpu.dynamic_rotate %83 by %c96_i32_26 dim 1 : vector<8x128xf32>, i32 -> vector<8x128xf32>
    %c64_i32_27 = arith.constant 64 : i32
    %86 = tpu.dynamic_rotate %84 by %c64_i32_27 dim 1 : vector<8x128xf32>, i32 -> vector<8x128xf32>
    %c32_i32_28 = arith.constant 32 : i32
    %87 = tpu.dynamic_rotate %83 by %c32_i32_28 dim 1 : vector<8x128xf32>, i32 -> vector<8x128xf32>
    %88 = arith.mulf %85, %67 : vector<8x128xf32>
    %89 = arith.mulf %83, %86 : vector<8x128xf32>
    %90 = arith.addf %88, %89 : vector<8x128xf32>
    %91 = math.tanh %90 : vector<8x128xf32>
    %92 = arith.mulf %87, %91 : vector<8x128xf32>
    %93 = arith.index_cast %73 : i32 to index
    %c0_29 = arith.constant 0 : index
    %94 = vector.load %arg6[%93, %c0_29] : memref<64x128xf32, #tpu.memory_space<vmem>>, vector<8x128xf32>
    tpu.vector_store %arg6[%93, %c0_29], %92 {strides = array<i32>} : memref<64x128xf32, #tpu.memory_space<vmem>>, vector<8x128xf32>,
    %c4_i32 = arith.constant 4 : i32
    %c8_i32_30 = arith.constant 8 : i32
    %95 = arith.muli %c4_i32, %c8_i32_30 : i32
    %96 = tpu.assume_multiple %95, 8 : i32
    %97 = arith.index_cast %96 : i32 to index
    %c0_31 = arith.constant 0 : index
    %98 = vector.load %arg1[%97, %c0_31] : memref<64x128xf32, #tpu.memory_space<vmem>>, vector<8x128xf32>
    %99 = arith.truncf %92 : vector<8x128xf32> to vector<8x128xbf16>
    %cst_32 = arith.constant dense<0.000000e+00> : vector<8x128xf32>
    %100 = tpu.matmul %99, %0, %cst_32 {dimension_numbers = #tpu.dot_dimension_numbers<[1], [0], [0], [1], [0, 0, 1, 1], [], []>} : vector<8x128xbf16>, vector<128x128xbf16>, vector<8x128xf32> -> vector<8x128xf32>
    %101 = arith.addf %98, %100 : vector<8x128xf32>
    %102 = arith.negf %101 : vector<8x128xf32>
    %103 = math.exp %102 : vector<8x128xf32>
    %cst_33 = arith.constant 1.000000e+00 : f32
    %104 = vector.broadcast %cst_33 : f32 to vector<8x128xf32>
    %105 = arith.addf %104, %103 : vector<8x128xf32>
    %106 = arith.divf %104, %105 : vector<8x128xf32>
    %107 = math.tanh %101 : vector<8x128xf32>
    %c96_i32_34 = arith.constant 96 : i32
    %108 = tpu.dynamic_rotate %106 by %c96_i32_34 dim 1 : vector<8x128xf32>, i32 -> vector<8x128xf32>
    %c64_i32_35 = arith.constant 64 : i32
    %109 = tpu.dynamic_rotate %107 by %c64_i32_35 dim 1 : vector<8x128xf32>, i32 -> vector<8x128xf32>
    %c32_i32_36 = arith.constant 32 : i32
    %110 = tpu.dynamic_rotate %106 by %c32_i32_36 dim 1 : vector<8x128xf32>, i32 -> vector<8x128xf32>
    %111 = arith.mulf %108, %90 : vector<8x128xf32>
    %112 = arith.mulf %106, %109 : vector<8x128xf32>
    %113 = arith.addf %111, %112 : vector<8x128xf32>
    %114 = math.tanh %113 : vector<8x128xf32>
    %115 = arith.mulf %110, %114 : vector<8x128xf32>
    %116 = arith.index_cast %96 : i32 to index
    %c0_37 = arith.constant 0 : index
    %117 = vector.load %arg6[%116, %c0_37] : memref<64x128xf32, #tpu.memory_space<vmem>>, vector<8x128xf32>
    tpu.vector_store %arg6[%116, %c0_37], %115 {strides = array<i32>} : memref<64x128xf32, #tpu.memory_space<vmem>>, vector<8x128xf32>,
    %c5_i32 = arith.constant 5 : i32
    %c8_i32_38 = arith.constant 8 : i32
    %118 = arith.muli %c5_i32, %c8_i32_38 : i32
    %119 = tpu.assume_multiple %118, 8 : i32
    %120 = arith.index_cast %119 : i32 to index
    %c0_39 = arith.constant 0 : index
    %121 = vector.load %arg1[%120, %c0_39] : memref<64x128xf32, #tpu.memory_space<vmem>>, vector<8x128xf32>
    %122 = arith.truncf %115 : vector<8x128xf32> to vector<8x128xbf16>
    %cst_40 = arith.constant dense<0.000000e+00> : vector<8x128xf32>
    %123 = tpu.matmul %122, %0, %cst_40 {dimension_numbers = #tpu.dot_dimension_numbers<[1], [0], [0], [1], [0, 0, 1, 1], [], []>} : vector<8x128xbf16>, vector<128x128xbf16>, vector<8x128xf32> -> vector<8x128xf32>
    %124 = arith.addf %121, %123 : vector<8x128xf32>
    %125 = arith.negf %124 : vector<8x128xf32>
    %126 = math.exp %125 : vector<8x128xf32>
    %cst_41 = arith.constant 1.000000e+00 : f32
    %127 = vector.broadcast %cst_41 : f32 to vector<8x128xf32>
    %128 = arith.addf %127, %126 : vector<8x128xf32>
    %129 = arith.divf %127, %128 : vector<8x128xf32>
    %130 = math.tanh %124 : vector<8x128xf32>
    %c96_i32_42 = arith.constant 96 : i32
    %131 = tpu.dynamic_rotate %129 by %c96_i32_42 dim 1 : vector<8x128xf32>, i32 -> vector<8x128xf32>
    %c64_i32_43 = arith.constant 64 : i32
    %132 = tpu.dynamic_rotate %130 by %c64_i32_43 dim 1 : vector<8x128xf32>, i32 -> vector<8x128xf32>
    %c32_i32_44 = arith.constant 32 : i32
    %133 = tpu.dynamic_rotate %129 by %c32_i32_44 dim 1 : vector<8x128xf32>, i32 -> vector<8x128xf32>
    %134 = arith.mulf %131, %113 : vector<8x128xf32>
    %135 = arith.mulf %129, %132 : vector<8x128xf32>
    %136 = arith.addf %134, %135 : vector<8x128xf32>
    %137 = math.tanh %136 : vector<8x128xf32>
    %138 = arith.mulf %133, %137 : vector<8x128xf32>
    %139 = arith.index_cast %119 : i32 to index
    %c0_45 = arith.constant 0 : index
    %140 = vector.load %arg6[%139, %c0_45] : memref<64x128xf32, #tpu.memory_space<vmem>>, vector<8x128xf32>
    tpu.vector_store %arg6[%139, %c0_45], %138 {strides = array<i32>} : memref<64x128xf32, #tpu.memory_space<vmem>>, vector<8x128xf32>,
    %c6_i32 = arith.constant 6 : i32
    %c8_i32_46 = arith.constant 8 : i32
    %141 = arith.muli %c6_i32, %c8_i32_46 : i32
    %142 = tpu.assume_multiple %141, 8 : i32
    %143 = arith.index_cast %142 : i32 to index
    %c0_47 = arith.constant 0 : index
    %144 = vector.load %arg1[%143, %c0_47] : memref<64x128xf32, #tpu.memory_space<vmem>>, vector<8x128xf32>
    %145 = arith.truncf %138 : vector<8x128xf32> to vector<8x128xbf16>
    %cst_48 = arith.constant dense<0.000000e+00> : vector<8x128xf32>
    %146 = tpu.matmul %145, %0, %cst_48 {dimension_numbers = #tpu.dot_dimension_numbers<[1], [0], [0], [1], [0, 0, 1, 1], [], []>} : vector<8x128xbf16>, vector<128x128xbf16>, vector<8x128xf32> -> vector<8x128xf32>
    %147 = arith.addf %144, %146 : vector<8x128xf32>
    %148 = arith.negf %147 : vector<8x128xf32>
    %149 = math.exp %148 : vector<8x128xf32>
    %cst_49 = arith.constant 1.000000e+00 : f32
    %150 = vector.broadcast %cst_49 : f32 to vector<8x128xf32>
    %151 = arith.addf %150, %149 : vector<8x128xf32>
    %152 = arith.divf %150, %151 : vector<8x128xf32>
    %153 = math.tanh %147 : vector<8x128xf32>
    %c96_i32_50 = arith.constant 96 : i32
    %154 = tpu.dynamic_rotate %152 by %c96_i32_50 dim 1 : vector<8x128xf32>, i32 -> vector<8x128xf32>
    %c64_i32_51 = arith.constant 64 : i32
    %155 = tpu.dynamic_rotate %153 by %c64_i32_51 dim 1 : vector<8x128xf32>, i32 -> vector<8x128xf32>
    %c32_i32_52 = arith.constant 32 : i32
    %156 = tpu.dynamic_rotate %152 by %c32_i32_52 dim 1 : vector<8x128xf32>, i32 -> vector<8x128xf32>
    %157 = arith.mulf %154, %136 : vector<8x128xf32>
    %158 = arith.mulf %152, %155 : vector<8x128xf32>
    %159 = arith.addf %157, %158 : vector<8x128xf32>
    %160 = math.tanh %159 : vector<8x128xf32>
    %161 = arith.mulf %156, %160 : vector<8x128xf32>
    %162 = arith.index_cast %142 : i32 to index
    %c0_53 = arith.constant 0 : index
    %163 = vector.load %arg6[%162, %c0_53] : memref<64x128xf32, #tpu.memory_space<vmem>>, vector<8x128xf32>
    tpu.vector_store %arg6[%162, %c0_53], %161 {strides = array<i32>} : memref<64x128xf32, #tpu.memory_space<vmem>>, vector<8x128xf32>,
    %c7_i32 = arith.constant 7 : i32
    %c8_i32_54 = arith.constant 8 : i32
    %164 = arith.muli %c7_i32, %c8_i32_54 : i32
    %165 = tpu.assume_multiple %164, 8 : i32
    %166 = arith.index_cast %165 : i32 to index
    %c0_55 = arith.constant 0 : index
    %167 = vector.load %arg1[%166, %c0_55] : memref<64x128xf32, #tpu.memory_space<vmem>>, vector<8x128xf32>
    %168 = arith.truncf %161 : vector<8x128xf32> to vector<8x128xbf16>
    %cst_56 = arith.constant dense<0.000000e+00> : vector<8x128xf32>
    %169 = tpu.matmul %168, %0, %cst_56 {dimension_numbers = #tpu.dot_dimension_numbers<[1], [0], [0], [1], [0, 0, 1, 1], [], []>} : vector<8x128xbf16>, vector<128x128xbf16>, vector<8x128xf32> -> vector<8x128xf32>
    %170 = arith.addf %167, %169 : vector<8x128xf32>
    %171 = arith.negf %170 : vector<8x128xf32>
    %172 = math.exp %171 : vector<8x128xf32>
    %cst_57 = arith.constant 1.000000e+00 : f32
    %173 = vector.broadcast %cst_57 : f32 to vector<8x128xf32>
    %174 = arith.addf %173, %172 : vector<8x128xf32>
    %175 = arith.divf %173, %174 : vector<8x128xf32>
    %176 = math.tanh %170 : vector<8x128xf32>
    %c96_i32_58 = arith.constant 96 : i32
    %177 = tpu.dynamic_rotate %175 by %c96_i32_58 dim 1 : vector<8x128xf32>, i32 -> vector<8x128xf32>
    %c64_i32_59 = arith.constant 64 : i32
    %178 = tpu.dynamic_rotate %176 by %c64_i32_59 dim 1 : vector<8x128xf32>, i32 -> vector<8x128xf32>
    %c32_i32_60 = arith.constant 32 : i32
    %179 = tpu.dynamic_rotate %175 by %c32_i32_60 dim 1 : vector<8x128xf32>, i32 -> vector<8x128xf32>
    %180 = arith.mulf %177, %159 : vector<8x128xf32>
    %181 = arith.mulf %175, %178 : vector<8x128xf32>
    %182 = arith.addf %180, %181 : vector<8x128xf32>
    %183 = math.tanh %182 : vector<8x128xf32>
    %184 = arith.mulf %179, %183 : vector<8x128xf32>
    %185 = arith.index_cast %165 : i32 to index
    %c0_61 = arith.constant 0 : index
    %186 = vector.load %arg6[%185, %c0_61] : memref<64x128xf32, #tpu.memory_space<vmem>>, vector<8x128xf32>
    tpu.vector_store %arg6[%185, %c0_61], %184 {strides = array<i32>} : memref<64x128xf32, #tpu.memory_space<vmem>>, vector<8x128xf32>,
    %c8_i32_62 = arith.constant 8 : i32
    %c0_63 = arith.constant 0 : index
    %c0_64 = arith.constant 0 : index
    %187 = vector.load %arg6[%c0_63, %c0_64] : memref<64x128xf32, #tpu.memory_space<vmem>>, vector<64x128xf32>
    %188 = arith.truncf %187 : vector<64x128xf32> to vector<64x128xbf16>
    %c0_65 = arith.constant 0 : index
    %c0_66 = arith.constant 0 : index
    %189 = vector.load %arg3[%c0_65, %c0_66] : memref<128x128xbf16, #tpu.memory_space<vmem>>, vector<128x128xbf16>
    %cst_67 = arith.constant dense<0.000000e+00> : vector<64x128xf32>
    %190 = tpu.matmul %188, %189, %cst_67 {dimension_numbers = #tpu.dot_dimension_numbers<[1], [0], [0], [1], [0, 0, 1, 1], [], []>} : vector<64x128xbf16>, vector<128x128xbf16>, vector<64x128xf32> -> vector<64x128xf32>
    %c0_68 = arith.constant 0 : index
    %c0_69 = arith.constant 0 : index
    %191 = vector.load %arg4[%c0_68, %c0_69] : memref<1x128xf32, #tpu.memory_space<vmem>>, vector<1x128xf32>
    %192 = vector.broadcast %191 : vector<1x128xf32> to vector<64x128xf32>
    %193 = arith.addf %190, %192 : vector<64x128xf32>
    %c0_70 = arith.constant 0 : index
    %c0_71 = arith.constant 0 : index
    %194 = vector.load %arg5[%c0_70, %c0_71] : memref<64x128xf32, #tpu.memory_space<vmem>>, vector<64x128xf32>
    tpu.vector_store %arg5[%c0_70, %c0_71], %193 {strides = array<i32>} : memref<64x128xf32, #tpu.memory_space<vmem>>, vector<64x128xf32>,
    return
  }
  func.func @transform_0(%arg0: i32) -> (i32, i32) {
    %c0_i32 = arith.constant 0 : i32
    %c0_i32_0 = arith.constant 0 : i32
    return %arg0, %c0_i32 : i32, i32
  }
  func.func @transform_1(%arg0: i32) -> (i32, i32) {
    %c0_i32 = arith.constant 0 : i32
    %c0_i32_0 = arith.constant 0 : i32
    %c0_i32_1 = arith.constant 0 : i32
    return %c0_i32, %c0_i32_0 : i32, i32
  }
  func.func @transform_2(%arg0: i32) -> (i32, i32) {
    %c0_i32 = arith.constant 0 : i32
    %c0_i32_0 = arith.constant 0 : i32
    %c0_i32_1 = arith.constant 0 : i32
    return %c0_i32, %c0_i32_0 : i32, i32
  }
  func.func @transform_3(%arg0: i32) -> (i32, i32) {
    %c0_i32 = arith.constant 0 : i32
    %c0_i32_0 = arith.constant 0 : i32
    %c0_i32_1 = arith.constant 0 : i32
    return %c0_i32, %c0_i32_0 : i32, i32
  }
  func.func @transform_4(%arg0: i32) -> (i32, i32) {
    %c0_i32 = arith.constant 0 : i32
    %c0_i32_0 = arith.constant 0 : i32
    return %arg0, %c0_i32 : i32, i32
  }
}

</mosaic_0001>

<llo_original>
// kernel: tpu_custom_call.1
$region0: #{tpu_custom_call.1}
  #allocation0 [shape = 'u32[]', space=smem, size = 0x4, offset = 0x4, fixed_abs, tag = 'smem constant byte address 0x4 - core index']
  #allocation1 [shape = 'u32[144,128]{1,0:T(1,128)}', space=vmem, size = 0x12000, scoped, tag = 'internal scratch']
  #allocation2 [shape = 'f32[64,128]{1,0:T(8,128)}', space=vmem, size = 0x8000, scoped, tag = 'scratch operand']
  %s0 = inlined_call_operand.hbm [shape: f32[64,128], index: 0, kind: input, shape index: {}]
  %s1 = inlined_call_operand.hbm [shape: bf16[128,128], index: 1, kind: input, shape index: {}]
  %s2 = inlined_call_operand.hbm [shape: bf16[128,128], index: 2, kind: input, shape index: {}]
  %s3 = inlined_call_operand.vmem [shape: f32[1,128], index: 3, kind: input, shape index: {}]
  %s4 = inlined_call_operand.hbm [shape: f32[64,128], index: 4, kind: output, shape index: {}]
  %s5 = sld [smem:[#allocation0]]
  $region38: #{tpu_custom_call.1} parent=0
    _
  %s7 = ssub.s32 1, %s5
  %s8 = scalar_select 0, %s7, %s5
  $region1: #{tpu_custom_call.1} parent=0
    #allocation3 [shape = 'u8[32768]{0}', space=vmem, size = 0x8000, scoped, tag = 'input window, operand 0, single buffered']
    #allocation4 [shape = 's32[1]{0}', space=sflag, size = 0x4, scoped, tag = 'scoped memory for tpu_custom_call.1']
    #allocation5 [shape = 's32[1]{0}', space=sflag, size = 0x4, scoped, tag = 'scoped memory for tpu_custom_call.1']
    #allocation6 [shape = 'u8[32768]{0}', space=vmem, size = 0x8000, scoped, tag = 'input window, operand 1, single buffered']
    #allocation7 [shape = 's32[1]{0}', space=sflag, size = 0x4, scoped, tag = 'scoped memory for tpu_custom_call.1']
    #allocation8 [shape = 'u8[32768]{0}', space=vmem, size = 0x8000, scoped, tag = 'input window, operand 2, single buffered']
    #allocation9 [shape = 'u8[32768]{0}', space=vmem, size = 0x8000, scoped, tag = 'output window, operand 0, single buffered']
    %9 = vsyncpa [#allocation4], 0
    %10 = vsyncpa [#allocation7], 0
    %11 = vsyncpa [#allocation5], 0
    // Predicated region
    $region2: #{tpu_custom_call.1} parent=1 // pred_check
      _
    $region3: #{tpu_custom_call.1} parent=1 // pred_check_branch
      %13 = sbr.rel (0) target = $region5
    $region4: #{tpu_custom_call.1} parent=1 // pred_region
      %s15 = ssub.s32 1024, 1024
      %16 = vsyncadd [#allocation4], %s15
      %s17 = sshll.u32 [#allocation3], 4
      %s18 = int_to_ptr.vmem [resolvable:$true] %s17
      %23 = dma.hbm_to_vmem [thread:$0]  %s0, 1024, %s18, [#allocation4], 128, 128, 8
    $region5: #{tpu_custom_call.1} parent=1 // pred_fallthru
      _
    // Predicated region
    $region6: #{tpu_custom_call.1} parent=1 // pred_check
      _
    $region7: #{tpu_custom_call.1} parent=1 // pred_check_branch
      %25 = sbr.rel (0) target = $region9
    $region8: #{tpu_custom_call.1} parent=1 // pred_region
      %s27 = ssub.s32 1024, 1024
      %28 = vsyncadd [#allocation7], %s27
      %s29 = sshll.u32 [#allocation6], 4
      %s30 = int_to_ptr.vmem [resolvable:$true] %s29
      %35 = dma.hbm_to_vmem [thread:$0]  %s1, 1024, %s30, [#allocation7], 64, 64, 4
    $region9: #{tpu_custom_call.1} parent=1 // pred_fallthru
      _
    // Predicated region
    $region10: #{tpu_custom_call.1} parent=1 // pred_check
      _
    $region11: #{tpu_custom_call.1} parent=1 // pred_check_branch
      %37 = sbr.rel (0) target = $region13
    $region12: #{tpu_custom_call.1} parent=1 // pred_region
      %s39 = ssub.s32 1024, 1024
      %40 = vsyncadd [#allocation7], %s39
      %s41 = sshll.u32 [#allocation8], 4
      %s42 = int_to_ptr.vmem [resolvable:$true] %s41
      %47 = dma.hbm_to_vmem [thread:$0]  %s2, 1024, %s42, [#allocation7], 64, 64, 4
    $region13: #{tpu_custom_call.1} parent=1 // pred_fallthru
      _
    // Predicated region
    $region14: #{tpu_custom_call.1} parent=1 // pred_check
      _
    $region15: #{tpu_custom_call.1} parent=1 // pred_check_branch
      %49 = sbr.rel (0) target = $region17
    $region16: #{tpu_custom_call.1} parent=1 // pred_region
      _
    $region17: #{tpu_custom_call.1} parent=1 // pred_fallthru
      _
    // Predicated region
    $region18: #{tpu_custom_call.1} parent=1 // pred_check
      _
    $region19: #{tpu_custom_call.1} parent=1 // pred_check_branch
      %51 = sbr.rel (0) target = $region21
    $region20: #{tpu_custom_call.1} parent=1 // pred_region
      %52 = dma.done [#allocation4], 1024
    $region21: #{tpu_custom_call.1} parent=1 // pred_fallthru
      _
    // Predicated region
    $region22: #{tpu_custom_call.1} parent=1 // pred_check
      _
    $region23: #{tpu_custom_call.1} parent=1 // pred_check_branch
      %54 = sbr.rel (0) target = $region25
    $region24: #{tpu_custom_call.1} parent=1 // pred_region
      %55 = dma.done [#allocation7], 1024
    $region25: #{tpu_custom_call.1} parent=1 // pred_fallthru
      _
    // Predicated region
    $region26: #{tpu_custom_call.1} parent=1 // pred_check
      _
    $region27: #{tpu_custom_call.1} parent=1 // pred_check_branch
      %57 = sbr.rel (0) target = $region29
    $region28: #{tpu_custom_call.1} parent=1 // pred_region
      %58 = dma.done [#allocation7], 1024
    $region29: #{tpu_custom_call.1} parent=1 // pred_fallthru
      _
    %v60 = vld [vmem:[#allocation6] sm:$0xf]
    %v61 = vld [vmem:[#allocation6 + $0x4] sm:$0xf]
    %v62 = vld [vmem:[#allocation6 + $0x8] sm:$0xf]
    %v63 = vld [vmem:[#allocation6 + $0xc] sm:$0xf]
    %v64 = vld [vmem:[#allocation6 + $0x10] sm:$0xf]
    %v65 = vld [vmem:[#allocation6 + $0x14] sm:$0xf]
    %v66 = vld [vmem:[#allocation6 + $0x18] sm:$0xf]
    %v67 = vld [vmem:[#allocation6 + $0x1c] sm:$0xf]
    %v68 = vld [vmem:[#allocation6 + $0x20] sm:$0xf]
    %v69 = vld [vmem:[#allocation6 + $0x24] sm:$0xf]
    %v70 = vld [vmem:[#allocation6 + $0x28] sm:$0xf]
    %v71 = vld [vmem:[#allocation6 + $0x2c] sm:$0xf]
    %v72 = vld [vmem:[#allocation6 + $0x30] sm:$0xf]
    %v73 = vld [vmem:[#allocation6 + $0x34] sm:$0xf]
    %v74 = vld [vmem:[#allocation6 + $0x38] sm:$0xf]
    %v75 = vld [vmem:[#allocation6 + $0x3c] sm:$0xf]
    %v76 = vld [vmem:[#allocation3] sm:$0xff]
    %v93 = vunpack.c.l.b16 %v60
    %v94 = vunpack.c.l.b16 %v61
    %v95 = vunpack.c.l.b16 %v62
    %v96 = vunpack.c.l.b16 %v63
    %v97 = vunpack.c.l.b16 %v64
    %v98 = vunpack.c.l.b16 %v65
    %v99 = vunpack.c.l.b16 %v66
    %v100 = vunpack.c.l.b16 %v67
    %v101 = vunpack.c.l.b16 %v68
    %v102 = vunpack.c.l.b16 %v69
    %v103 = vunpack.c.l.b16 %v70
    %v104 = vunpack.c.l.b16 %v71
    %v105 = vunpack.c.l.b16 %v72
    %v106 = vunpack.c.l.b16 %v73
    %v107 = vunpack.c.l.b16 %v74
    %v108 = vunpack.c.l.b16 %v75
    %v109 = vpack.c.b16 %v94, %v93
    %v110 = vpack.c.b16 %v96, %v95
    %v111 = vpack.c.b16 %v98, %v97
    %v112 = vpack.c.b16 %v100, %v99
    %v113 = vpack.c.b16 %v102, %v101
    %v114 = vpack.c.b16 %v104, %v103
    %v115 = vpack.c.b16 %v106, %v105
    %v116 = vpack.c.b16 %v108, %v107
    %125 = vmatprep.subr.bf16.mxu0 0
    %126 = vmatpush1.bf16.msra.mxu0 %v109
    %127 = vmatprep.subr.bf16.mxu0 0
    %128 = vmatpush1.bf16.msra.mxu0 %v110
    %129 = vmatprep.subr.bf16.mxu0 0
    %130 = vmatpush1.bf16.msra.mxu0 %v111
    %131 = vmatprep.subr.bf16.mxu0 0
    %132 = vmatpush1.bf16.msra.mxu0 %v112
    %133 = vmatprep.subr.bf16.mxu0 0
    %134 = vmatpush1.bf16.msra.mxu0 %v113
    %135 = vmatprep.subr.bf16.mxu0 0
    %136 = vmatpush1.bf16.msra.mxu0 %v114
    %137 = vmatprep.subr.bf16.mxu0 0
    %138 = vmatpush1.bf16.msra.mxu0 %v115
    %139 = vmatprep.subr.bf16.mxu0 0
    %140 = vmatpush1.bf16.msra.mxu0 %v116
    %141 = vmatprep.subr.bf16.mxu0 0
    %142 = vmatpush1.bf16.msra.mxu0 0
    %143 = vmatprep.subr.bf16.mxu0 0
    %144 = vmatpush1.bf16.msra.mxu0 0
    %145 = vmatprep.subr.bf16.mxu0 0
    %146 = vmatpush1.bf16.msra.mxu0 0
    %147 = vmatprep.subr.bf16.mxu0 0
    %148 = vmatpush1.bf16.msra.mxu0 0
    %149 = vmatprep.subr.bf16.mxu0 0
    %150 = vmatpush1.bf16.msra.mxu0 0
    %151 = vmatprep.subr.bf16.mxu0 0
    %152 = vmatpush1.bf16.msra.mxu0 0
    %153 = vmatprep.subr.bf16.mxu0 0
    %154 = vmatpush1.bf16.msra.mxu0 0
    %155 = vmatprep.subr.bf16.mxu0 0
    %156 = vmatpush1.bf16.msra.mxu0 0
    %157 = vmatprep.mubr.bf16.mxu0 0
    %158 = vmatmul.mubr.bf16.gmra.mrb[0].mxu0 0
    %v159 = vpop.f32.mrb[0].mxu0
    %v160 = vadd.f32 0.0, %v159
    %v161 = vpop.f32.mrb[0].mxu0
    %v162 = vpop.f32.mrb[0].mxu0
    %v163 = vpop.f32.mrb[0].mxu0
    %164 = vdwg.mxu0
    %v165 = vadd.f32 %v76, %v160
    %v166 = vxor.u32 %v165, 2147483648
    %v167 = vmul.f32 %v166, 1.442695
    %v168 = vpow.pop %v167
    %v169 = vadd.f32 %v168, 1.0
    %v170 = vrcp.pop %v169
    %v171 = vmul.f32 1.0, %v170
    %v172 = vtanh.pop %v165
    %173 = vrot.lane.b32.xlu0 %v171, 96
    %v174 = vpop.permute.xlu0 %173
    %175 = vrot.lane.b32.xlu0 %v172, 64
    %v176 = vpop.permute.xlu0 %175
    %177 = vrot.lane.b32.xlu0 %v171, 32
    %v178 = vpop.permute.xlu0 %177
    %v179 = vmul.f32 %v174, 0.0
    %v180 = vmul.f32 %v171, %v176
    %v181 = vadd.f32 %v179, %v180
    %v182 = vtanh.pop %v181
    %v183 = vmul.f32 %v178, %v182
    %184 = vst [vmem:[#allocation2] sm:$0xff] %v183
    %s185 = scalar_lea.vmem [#allocation3], 8
    %v186 = vld [vmem:[%s185] sm:$0xff]
    %v187 = vpack.c.bf16 %v183, %v183
    %188 = vmatprep.subr.bf16.mxu0 0
    %189 = vmatpush1.bf16.msra.mxu0 %v109
    %190 = vmatprep.subr.bf16.mxu0 0
    %191 = vmatpush1.bf16.msra.mxu0 %v110
    %192 = vmatprep.subr.bf16.mxu0 0
    %193 = vmatpush1.bf16.msra.mxu0 %v111
    %194 = vmatprep.subr.bf16.mxu0 0
    %195 = vmatpush1.bf16.msra.mxu0 %v112
    %196 = vmatprep.subr.bf16.mxu0 0
    %197 = vmatpush1.bf16.msra.mxu0 %v113
    %198 = vmatprep.subr.bf16.mxu0 0
    %199 = vmatpush1.bf16.msra.mxu0 %v114
    %200 = vmatprep.subr.bf16.mxu0 0
    %201 = vmatpush1.bf16.msra.mxu0 %v115
    %202 = vmatprep.subr.bf16.mxu0 0
    %203 = vmatpush1.bf16.msra.mxu0 %v116
    %204 = vmatprep.subr.bf16.mxu0 0
    %205 = vmatpush1.bf16.msra.mxu0 0
    %206 = vmatprep.subr.bf16.mxu0 0
    %207 = vmatpush1.bf16.msra.mxu0 0
    %208 = vmatprep.subr.bf16.mxu0 0
    %209 = vmatpush1.bf16.msra.mxu0 0
    %210 = vmatprep.subr.bf16.mxu0 0
    %211 = vmatpush1.bf16.msra.mxu0 0
    %212 = vmatprep.subr.bf16.mxu0 0
    %213 = vmatpush1.bf16.msra.mxu0 0
    %214 = vmatprep.subr.bf16.mxu0 0
    %215 = vmatpush1.bf16.msra.mxu0 0
    %216 = vmatprep.subr.bf16.mxu0 0
    %217 = vmatpush1.bf16.msra.mxu0 0
    %218 = vmatprep.subr.bf16.mxu0 0
    %219 = vmatpush1.bf16.msra.mxu0 0
    %220 = vmatprep.mubr.bf16.mxu0 0
    %221 = vmatmul.mubr.bf16.gmra.mrb[0].mxu0 %v187
    %v222 = vpop.f32.mrb[0].mxu0
    %v223 = vadd.f32 0.0, %v222
    %v224 = vpop.f32.mrb[0].mxu0
    %v225 = vpop.f32.mrb[0].mxu0
    %v226 = vpop.f32.mrb[0].mxu0
    %227 = vdwg.mxu0
    %v228 = vadd.f32 %v186, %v223
    %v229 = vxor.u32 %v228, 2147483648
    %v230 = vmul.f32 %v229, 1.442695
    %v231 = vpow.pop %v230
    %v232 = vadd.f32 %v231, 1.0
    %v233 = vrcp.pop %v232
    %v234 = vmul.f32 1.0, %v233
    %v235 = vtanh.pop %v228
    %236 = vrot.lane.b32.xlu0 %v234, 96
    %v237 = vpop.permute.xlu0 %236
    %238 = vrot.lane.b32.xlu0 %v235, 64
    %v239 = vpop.permute.xlu0 %238
    %240 = vrot.lane.b32.xlu0 %v234, 32
    %v241 = vpop.permute.xlu0 %240
    %v242 = vmul.f32 %v237, %v181
    %v243 = vmul.f32 %v234, %v239
    %v244 = vadd.f32 %v242, %v243
    %v245 = vtanh.pop %v244
    %v246 = vmul.f32 %v241, %v245
    %s247 = scalar_lea.vmem [#allocation2], 8
    %248 = vst [vmem:[%s247] sm:$0xff] %v246
    %s249 = scalar_lea.vmem [#allocation3], 16
    %v250 = vld [vmem:[%s249] sm:$0xff]
    %v251 = vpack.c.bf16 %v246, %v246
    %252 = vmatprep.subr.bf16.mxu0 0
    %253 = vmatpush1.bf16.msra.mxu0 %v109
    %254 = vmatprep.subr.bf16.mxu0 0
    %255 = vmatpush1.bf16.msra.mxu0 %v110
    %256 = vmatprep.subr.bf16.mxu0 0
    %257 = vmatpush1.bf16.msra.mxu0 %v111
    %258 = vmatprep.subr.bf16.mxu0 0
    %259 = vmatpush1.bf16.msra.mxu0 %v112
    %260 = vmatprep.subr.bf16.mxu0 0
    %261 = vmatpush1.bf16.msra.mxu0 %v113
    %262 = vmatprep.subr.bf16.mxu0 0
    %263 = vmatpush1.bf16.msra.mxu0 %v114
    %264 = vmatprep.subr.bf16.mxu0 0
    %265 = vmatpush1.bf16.msra.mxu0 %v115
    %266 = vmatprep.subr.bf16.mxu0 0
    %267 = vmatpush1.bf16.msra.mxu0 %v116
    %268 = vmatprep.subr.bf16.mxu0 0
    %269 = vmatpush1.bf16.msra.mxu0 0
    %270 = vmatprep.subr.bf16.mxu0 0
    %271 = vmatpush1.bf16.msra.mxu0 0
    %272 = vmatprep.subr.bf16.mxu0 0
    %273 = vmatpush1.bf16.msra.mxu0 0
    %274 = vmatprep.subr.bf16.mxu0 0
    %275 = vmatpush1.bf16.msra.mxu0 0
    %276 = vmatprep.subr.bf16.mxu0 0
    %277 = vmatpush1.bf16.msra.mxu0 0
    %278 = vmatprep.subr.bf16.mxu0 0
    %279 = vmatpush1.bf16.msra.mxu0 0
    %280 = vmatprep.subr.bf16.mxu0 0
    %281 = vmatpush1.bf16.msra.mxu0 0
    %282 = vmatprep.subr.bf16.mxu0 0
    %283 = vmatpush1.bf16.msra.mxu0 0
    %284 = vmatprep.mubr.bf16.mxu0 0
    %285 = vmatmul.mubr.bf16.gmra.mrb[0].mxu0 %v251
    %v286 = vpop.f32.mrb[0].mxu0
    %v287 = vadd.f32 0.0, %v286
    %v288 = vpop.f32.mrb[0].mxu0
    %v289 = vpop.f32.mrb[0].mxu0
    %v290 = vpop.f32.mrb[0].mxu0
    %291 = vdwg.mxu0
    %v292 = vadd.f32 %v250, %v287
    %v293 = vxor.u32 %v292, 2147483648
    %v294 = vmul.f32 %v293, 1.442695
    %v295 = vpow.pop %v294
    %v296 = vadd.f32 %v295, 1.0
    %v297 = vrcp.pop %v296
    %v298 = vmul.f32 1.0, %v297
    %v299 = vtanh.pop %v292
    %300 = vrot.lane.b32.xlu0 %v298, 96
    %v301 = vpop.permute.xlu0 %300
    %302 = vrot.lane.b32.xlu0 %v299, 64
    %v303 = vpop.permute.xlu0 %302
    %304 = vrot.lane.b32.xlu0 %v298, 32
    %v305 = vpop.permute.xlu0 %304
    %v306 = vmul.f32 %v301, %v244
    %v307 = vmul.f32 %v298, %v303
    %v308 = vadd.f32 %v306, %v307
    %v309 = vtanh.pop %v308
    %v310 = vmul.f32 %v305, %v309
    %s311 = scalar_lea.vmem [#allocation2], 16
    %312 = vst [vmem:[%s311] sm:$0xff] %v310
    %s313 = scalar_lea.vmem [#allocation3], 24
    %v314 = vld [vmem:[%s313] sm:$0xff]
    %v315 = vpack.c.bf16 %v310, %v310
    %316 = vmatprep.subr.bf16.mxu0 0
    %317 = vmatpush1.bf16.msra.mxu0 %v109
    %318 = vmatprep.subr.bf16.mxu0 0
    %319 = vmatpush1.bf16.msra.mxu0 %v110
    %320 = vmatprep.subr.bf16.mxu0 0
    %321 = vmatpush1.bf16.msra.mxu0 %v111
    %322 = vmatprep.subr.bf16.mxu0 0
    %323 = vmatpush1.bf16.msra.mxu0 %v112
    %324 = vmatprep.subr.bf16.mxu0 0
    %325 = vmatpush1.bf16.msra.mxu0 %v113
    %326 = vmatprep.subr.bf16.mxu0 0
    %327 = vmatpush1.bf16.msra.mxu0 %v114
    %328 = vmatprep.subr.bf16.mxu0 0
    %329 = vmatpush1.bf16.msra.mxu0 %v115
    %330 = vmatprep.subr.bf16.mxu0 0
    %331 = vmatpush1.bf16.msra.mxu0 %v116
    %332 = vmatprep.subr.bf16.mxu0 0
    %333 = vmatpush1.bf16.msra.mxu0 0
    %334 = vmatprep.subr.bf16.mxu0 0
    %335 = vmatpush1.bf16.msra.mxu0 0
    %336 = vmatprep.subr.bf16.mxu0 0
    %337 = vmatpush1.bf16.msra.mxu0 0
    %338 = vmatprep.subr.bf16.mxu0 0
    %339 = vmatpush1.bf16.msra.mxu0 0
    %340 = vmatprep.subr.bf16.mxu0 0
    %341 = vmatpush1.bf16.msra.mxu0 0
    %342 = vmatprep.subr.bf16.mxu0 0
    %343 = vmatpush1.bf16.msra.mxu0 0
    %344 = vmatprep.subr.bf16.mxu0 0
    %345 = vmatpush1.bf16.msra.mxu0 0
    %346 = vmatprep.subr.bf16.mxu0 0
    %347 = vmatpush1.bf16.msra.mxu0 0
    %348 = vmatprep.mubr.bf16.mxu0 0
    %349 = vmatmul.mubr.bf16.gmra.mrb[0].mxu0 %v315
    %v350 = vpop.f32.mrb[0].mxu0
    %v351 = vadd.f32 0.0, %v350
    %v352 = vpop.f32.mrb[0].mxu0
    %v353 = vpop.f32.mrb[0].mxu0
    %v354 = vpop.f32.mrb[0].mxu0
    %355 = vdwg.mxu0
    %v356 = vadd.f32 %v314, %v351
    %v357 = vxor.u32 %v356, 2147483648
    %v358 = vmul.f32 %v357, 1.442695
    %v359 = vpow.pop %v358
    %v360 = vadd.f32 %v359, 1.0
    %v361 = vrcp.pop %v360
    %v362 = vmul.f32 1.0, %v361
    %v363 = vtanh.pop %v356
    %364 = vrot.lane.b32.xlu0 %v362, 96
    %v365 = vpop.permute.xlu0 %364
    %366 = vrot.lane.b32.xlu0 %v363, 64
    %v367 = vpop.permute.xlu0 %366
    %368 = vrot.lane.b32.xlu0 %v362, 32
    %v369 = vpop.permute.xlu0 %368
    %v370 = vmul.f32 %v365, %v308
    %v371 = vmul.f32 %v362, %v367
    %v372 = vadd.f32 %v370, %v371
    %v373 = vtanh.pop %v372
    %v374 = vmul.f32 %v369, %v373
    %s375 = scalar_lea.vmem [#allocation2], 24
    %376 = vst [vmem:[%s375] sm:$0xff] %v374
    %s377 = scalar_lea.vmem [#allocation3], 32
    %v378 = vld [vmem:[%s377] sm:$0xff]
    %v379 = vpack.c.bf16 %v374, %v374
    %380 = vmatprep.subr.bf16.mxu0 0
    %381 = vmatpush1.bf16.msra.mxu0 %v109
    %382 = vmatprep.subr.bf16.mxu0 0
    %383 = vmatpush1.bf16.msra.mxu0 %v110
    %384 = vmatprep.subr.bf16.mxu0 0
    %385 = vmatpush1.bf16.msra.mxu0 %v111
    %386 = vmatprep.subr.bf16.mxu0 0
    %387 = vmatpush1.bf16.msra.mxu0 %v112
    %388 = vmatprep.subr.bf16.mxu0 0
    %389 = vmatpush1.bf16.msra.mxu0 %v113
    %390 = vmatprep.subr.bf16.mxu0 0
    %391 = vmatpush1.bf16.msra.mxu0 %v114
    %392 = vmatprep.subr.bf16.mxu0 0
    %393 = vmatpush1.bf16.msra.mxu0 %v115
    %394 = vmatprep.subr.bf16.mxu0 0
    %395 = vmatpush1.bf16.msra.mxu0 %v116
    %396 = vmatprep.subr.bf16.mxu0 0
    %397 = vmatpush1.bf16.msra.mxu0 0
    %398 = vmatprep.subr.bf16.mxu0 0
    %399 = vmatpush1.bf16.msra.mxu0 0
    %400 = vmatprep.subr.bf16.mxu0 0
    %401 = vmatpush1.bf16.msra.mxu0 0
    %402 = vmatprep.subr.bf16.mxu0 0
    %403 = vmatpush1.bf16.msra.mxu0 0
    %404 = vmatprep.subr.bf16.mxu0 0
    %405 = vmatpush1.bf16.msra.mxu0 0
    %406 = vmatprep.subr.bf16.mxu0 0
    %407 = vmatpush1.bf16.msra.mxu0 0
    %408 = vmatprep.subr.bf16.mxu0 0
    %409 = vmatpush1.bf16.msra.mxu0 0
    %410 = vmatprep.subr.bf16.mxu0 0
    %411 = vmatpush1.bf16.msra.mxu0 0
    %412 = vmatprep.mubr.bf16.mxu0 0
    %413 = vmatmul.mubr.bf16.gmra.mrb[0].mxu0 %v379
    %v414 = vpop.f32.mrb[0].mxu0
    %v415 = vadd.f32 0.0, %v414
    %v416 = vpop.f32.mrb[0].mxu0
    %v417 = vpop.f32.mrb[0].mxu0
    %v418 = vpop.f32.mrb[0].mxu0
    %419 = vdwg.mxu0
    %v420 = vadd.f32 %v378, %v415
    %v421 = vxor.u32 %v420, 2147483648
    %v422 = vmul.f32 %v421, 1.442695
    %v423 = vpow.pop %v422
    %v424 = vadd.f32 %v423, 1.0
    %v425 = vrcp.pop %v424
    %v426 = vmul.f32 1.0, %v425
    %v427 = vtanh.pop %v420
    %428 = vrot.lane.b32.xlu0 %v426, 96
    %v429 = vpop.permute.xlu0 %428
    %430 = vrot.lane.b32.xlu0 %v427, 64
    %v431 = vpop.permute.xlu0 %430
    %432 = vrot.lane.b32.xlu0 %v426, 32
    %v433 = vpop.permute.xlu0 %432
    %v434 = vmul.f32 %v429, %v372
    %v435 = vmul.f32 %v426, %v431
    %v436 = vadd.f32 %v434, %v435
    %v437 = vtanh.pop %v436
    %v438 = vmul.f32 %v433, %v437
    %s439 = scalar_lea.vmem [#allocation2], 32
    %440 = vst [vmem:[%s439] sm:$0xff] %v438
    %s441 = scalar_lea.vmem [#allocation3], 40
    %v442 = vld [vmem:[%s441] sm:$0xff]
    %v443 = vpack.c.bf16 %v438, %v438
    %444 = vmatprep.subr.bf16.mxu0 0
    %445 = vmatpush1.bf16.msra.mxu0 %v109
    %446 = vmatprep.subr.bf16.mxu0 0
    %447 = vmatpush1.bf16.msra.mxu0 %v110
    %448 = vmatprep.subr.bf16.mxu0 0
    %449 = vmatpush1.bf16.msra.mxu0 %v111
    %450 = vmatprep.subr.bf16.mxu0 0
    %451 = vmatpush1.bf16.msra.mxu0 %v112
    %452 = vmatprep.subr.bf16.mxu0 0
    %453 = vmatpush1.bf16.msra.mxu0 %v113
    %454 = vmatprep.subr.bf16.mxu0 0
    %455 = vmatpush1.bf16.msra.mxu0 %v114
    %456 = vmatprep.subr.bf16.mxu0 0
    %457 = vmatpush1.bf16.msra.mxu0 %v115
    %458 = vmatprep.subr.bf16.mxu0 0
    %459 = vmatpush1.bf16.msra.mxu0 %v116
    %460 = vmatprep.subr.bf16.mxu0 0
    %461 = vmatpush1.bf16.msra.mxu0 0
    %462 = vmatprep.subr.bf16.mxu0 0
    %463 = vmatpush1.bf16.msra.mxu0 0
    %464 = vmatprep.subr.bf16.mxu0 0
    %465 = vmatpush1.bf16.msra.mxu0 0
    %466 = vmatprep.subr.bf16.mxu0 0
    %467 = vmatpush1.bf16.msra.mxu0 0
    %468 = vmatprep.subr.bf16.mxu0 0
    %469 = vmatpush1.bf16.msra.mxu0 0
    %470 = vmatprep.subr.bf16.mxu0 0
    %471 = vmatpush1.bf16.msra.mxu0 0
    %472 = vmatprep.subr.bf16.mxu0 0
    %473 = vmatpush1.bf16.msra.mxu0 0
    %474 = vmatprep.subr.bf16.mxu0 0
    %475 = vmatpush1.bf16.msra.mxu0 0
    %476 = vmatprep.mubr.bf16.mxu0 0
    %477 = vmatmul.mubr.bf16.gmra.mrb[0].mxu0 %v443
    %v478 = vpop.f32.mrb[0].mxu0
    %v479 = vadd.f32 0.0, %v478
    %v480 = vpop.f32.mrb[0].mxu0
    %v481 = vpop.f32.mrb[0].mxu0
    %v482 = vpop.f32.mrb[0].mxu0
    %483 = vdwg.mxu0
    %v484 = vadd.f32 %v442, %v479
    %v485 = vxor.u32 %v484, 2147483648
    %v486 = vmul.f32 %v485, 1.442695
    %v487 = vpow.pop %v486
    %v488 = vadd.f32 %v487, 1.0
    %v489 = vrcp.pop %v488
    %v490 = vmul.f32 1.0, %v489
    %v491 = vtanh.pop %v484
    %492 = vrot.lane.b32.xlu0 %v490, 96
    %v493 = vpop.permute.xlu0 %492
    %494 = vrot.lane.b32.xlu0 %v491, 64
    %v495 = vpop.permute.xlu0 %494
    %496 = vrot.lane.b32.xlu0 %v490, 32
    %v497 = vpop.permute.xlu0 %496
    %v498 = vmul.f32 %v493, %v436
    %v499 = vmul.f32 %v490, %v495
    %v500 = vadd.f32 %v498, %v499
    %v501 = vtanh.pop %v500
    %v502 = vmul.f32 %v497, %v501
    %s503 = scalar_lea.vmem [#allocation2], 40
    %504 = vst [vmem:[%s503] sm:$0xff] %v502
    %s505 = scalar_lea.vmem [#allocation3], 48
    %v506 = vld [vmem:[%s505] sm:$0xff]
    %v507 = vpack.c.bf16 %v502, %v502
    %508 = vmatprep.subr.bf16.mxu0 0
    %509 = vmatpush1.bf16.msra.mxu0 %v109
    %510 = vmatprep.subr.bf16.mxu0 0
    %511 = vmatpush1.bf16.msra.mxu0 %v110
    %512 = vmatprep.subr.bf16.mxu0 0
    %513 = vmatpush1.bf16.msra.mxu0 %v111
    %514 = vmatprep.subr.bf16.mxu0 0
    %515 = vmatpush1.bf16.msra.mxu0 %v112
    %516 = vmatprep.subr.bf16.mxu0 0
    %517 = vmatpush1.bf16.msra.mxu0 %v113
    %518 = vmatprep.subr.bf16.mxu0 0
    %519 = vmatpush1.bf16.msra.mxu0 %v114
    %520 = vmatprep.subr.bf16.mxu0 0
    %521 = vmatpush1.bf16.msra.mxu0 %v115
    %522 = vmatprep.subr.bf16.mxu0 0
    %523 = vmatpush1.bf16.msra.mxu0 %v116
    %524 = vmatprep.subr.bf16.mxu0 0
    %525 = vmatpush1.bf16.msra.mxu0 0
    %526 = vmatprep.subr.bf16.mxu0 0
    %527 = vmatpush1.bf16.msra.mxu0 0
    %528 = vmatprep.subr.bf16.mxu0 0
    %529 = vmatpush1.bf16.msra.mxu0 0
    %530 = vmatprep.subr.bf16.mxu0 0
    %531 = vmatpush1.bf16.msra.mxu0 0
    %532 = vmatprep.subr.bf16.mxu0 0
    %533 = vmatpush1.bf16.msra.mxu0 0
    %534 = vmatprep.subr.bf16.mxu0 0
    %535 = vmatpush1.bf16.msra.mxu0 0
    %536 = vmatprep.subr.bf16.mxu0 0
    %537 = vmatpush1.bf16.msra.mxu0 0
    %538 = vmatprep.subr.bf16.mxu0 0
    %539 = vmatpush1.bf16.msra.mxu0 0
    %540 = vmatprep.mubr.bf16.mxu0 0
    %541 = vmatmul.mubr.bf16.gmra.mrb[0].mxu0 %v507
    %v542 = vpop.f32.mrb[0].mxu0
    %v543 = vadd.f32 0.0, %v542
    %v544 = vpop.f32.mrb[0].mxu0
    %v545 = vpop.f32.mrb[0].mxu0
    %v546 = vpop.f32.mrb[0].mxu0
    %547 = vdwg.mxu0
    %v548 = vadd.f32 %v506, %v543
    %v549 = vxor.u32 %v548, 2147483648
    %v550 = vmul.f32 %v549, 1.442695
    %v551 = vpow.pop %v550
    %v552 = vadd.f32 %v551, 1.0
    %v553 = vrcp.pop %v552
    %v554 = vmul.f32 1.0, %v553
    %v555 = vtanh.pop %v548
    %556 = vrot.lane.b32.xlu0 %v554, 96
    %v557 = vpop.permute.xlu0 %556
    %558 = vrot.lane.b32.xlu0 %v555, 64
    %v559 = vpop.permute.xlu0 %558
    %560 = vrot.lane.b32.xlu0 %v554, 32
    %v561 = vpop.permute.xlu0 %560
    %v562 = vmul.f32 %v557, %v500
    %v563 = vmul.f32 %v554, %v559
    %v564 = vadd.f32 %v562, %v563
    %v565 = vtanh.pop %v564
    %v566 = vmul.f32 %v561, %v565
    %s567 = scalar_lea.vmem [#allocation2], 48
    %568 = vst [vmem:[%s567] sm:$0xff] %v566
    %s569 = scalar_lea.vmem [#allocation3], 56
    %v570 = vld [vmem:[%s569] sm:$0xff]
    %v571 = vpack.c.bf16 %v566, %v566
    %572 = vmatprep.subr.bf16.mxu0 0
    %573 = vmatpush1.bf16.msra.mxu0 %v109
    %574 = vmatprep.subr.bf16.mxu0 0
    %575 = vmatpush1.bf16.msra.mxu0 %v110
    %576 = vmatprep.subr.bf16.mxu0 0
    %577 = vmatpush1.bf16.msra.mxu0 %v111
    %578 = vmatprep.subr.bf16.mxu0 0
    %579 = vmatpush1.bf16.msra.mxu0 %v112
    %580 = vmatprep.subr.bf16.mxu0 0
    %581 = vmatpush1.bf16.msra.mxu0 %v113
    %582 = vmatprep.subr.bf16.mxu0 0
    %583 = vmatpush1.bf16.msra.mxu0 %v114
    %584 = vmatprep.subr.bf16.mxu0 0
    %585 = vmatpush1.bf16.msra.mxu0 %v115
    %586 = vmatprep.subr.bf16.mxu0 0
    %587 = vmatpush1.bf16.msra.mxu0 %v116
    %588 = vmatprep.subr.bf16.mxu0 0
    %589 = vmatpush1.bf16.msra.mxu0 0
    %590 = vmatprep.subr.bf16.mxu0 0
    %591 = vmatpush1.bf16.msra.mxu0 0
    %592 = vmatprep.subr.bf16.mxu0 0
    %593 = vmatpush1.bf16.msra.mxu0 0
    %594 = vmatprep.subr.bf16.mxu0 0
    %595 = vmatpush1.bf16.msra.mxu0 0
    %596 = vmatprep.subr.bf16.mxu0 0
    %597 = vmatpush1.bf16.msra.mxu0 0
    %598 = vmatprep.subr.bf16.mxu0 0
    %599 = vmatpush1.bf16.msra.mxu0 0
    %600 = vmatprep.subr.bf16.mxu0 0
    %601 = vmatpush1.bf16.msra.mxu0 0
    %602 = vmatprep.subr.bf16.mxu0 0
    %603 = vmatpush1.bf16.msra.mxu0 0
    %604 = vmatprep.mubr.bf16.mxu0 0
    %605 = vmatmul.mubr.bf16.gmra.mrb[0].mxu0 %v571
    %v606 = vpop.f32.mrb[0].mxu0
    %v607 = vadd.f32 0.0, %v606
    %v608 = vpop.f32.mrb[0].mxu0
    %v609 = vpop.f32.mrb[0].mxu0
    %v610 = vpop.f32.mrb[0].mxu0
    %611 = vdwg.mxu0
    %v612 = vadd.f32 %v570, %v607
    %v613 = vxor.u32 %v612, 2147483648
    %v614 = vmul.f32 %v613, 1.442695
    %v615 = vpow.pop %v614
    %v616 = vadd.f32 %v615, 1.0
    %v617 = vrcp.pop %v616
    %v618 = vmul.f32 1.0, %v617
    %v619 = vtanh.pop %v612
    %620 = vrot.lane.b32.xlu0 %v618, 96
    %v621 = vpop.permute.xlu0 %620
    %622 = vrot.lane.b32.xlu0 %v619, 64
    %v623 = vpop.permute.xlu0 %622
    %624 = vrot.lane.b32.xlu0 %v618, 32
    %v625 = vpop.permute.xlu0 %624
    %v626 = vmul.f32 %v621, %v564
    %v627 = vmul.f32 %v618, %v623
    %v628 = vadd.f32 %v626, %v627
    %v629 = vtanh.pop %v628
    %v630 = vmul.f32 %v625, %v629
    %s631 = scalar_lea.vmem [#allocation2], 56
    %632 = vst [vmem:[%s631] sm:$0xff] %v630
    %v633 = vld [vmem:[#allocation2] sm:$0xff]
    %v634 = vld [vmem:[#allocation2 + $0x8] sm:$0xff]
    %v635 = vld [vmem:[#allocation2 + $0x10] sm:$0xff]
    %v636 = vld [vmem:[#allocation2 + $0x18] sm:$0xff]
    %v637 = vld [vmem:[#allocation2 + $0x20] sm:$0xff]
    %v638 = vld [vmem:[#allocation2 + $0x28] sm:$0xff]
    %v639 = vld [vmem:[#allocation2 + $0x30] sm:$0xff]
    %v640 = vld [vmem:[#allocation2 + $0x38] sm:$0xff]
    %v641 = vpack.c.bf16 %v634, %v633
    %v642 = vpack.c.bf16 %v636, %v635
    %v643 = vpack.c.bf16 %v638, %v637
    %v644 = vpack.c.bf16 %v640, %v639
    %v645 = vld [vmem:[#allocation8] sm:$0xf]
    %v646 = vld [vmem:[#allocation8 + $0x4] sm:$0xf]
    %v647 = vld [vmem:[#allocation8 + $0x8] sm:$0xf]
    %v648 = vld [vmem:[#allocation8 + $0xc] sm:$0xf]
    %v649 = vld [vmem:[#allocation8 + $0x10] sm:$0xf]
    %v650 = vld [vmem:[#allocation8 + $0x14] sm:$0xf]
    %v651 = vld [vmem:[#allocation8 + $0x18] sm:$0xf]
    %v652 = vld [vmem:[#allocation8 + $0x1c] sm:$0xf]
    %v653 = vld [vmem:[#allocation8 + $0x20] sm:$0xf]
    %v654 = vld [vmem:[#allocation8 + $0x24] sm:$0xf]
    %v655 = vld [vmem:[#allocation8 + $0x28] sm:$0xf]
    %v656 = vld [vmem:[#allocation8 + $0x2c] sm:$0xf]
    %v657 = vld [vmem:[#allocation8 + $0x30] sm:$0xf]
    %v658 = vld [vmem:[#allocation8 + $0x34] sm:$0xf]
    %v659 = vld [vmem:[#allocation8 + $0x38] sm:$0xf]
    %v660 = vld [vmem:[#allocation8 + $0x3c] sm:$0xf]
    %v661 = vld [vmem:[%s3] sm:$0x1]
    %v663 = vlaneseq
    %v664 = vshrl.u32 %v663, 7
    %v665 = vsub.s32 0, %v664
    %v666 = vrot.slane %v661, %v665
    %v684 = vunpack.c.l.b16 %v645
    %v685 = vunpack.c.l.b16 %v646
    %v686 = vunpack.c.l.b16 %v647
    %v687 = vunpack.c.l.b16 %v648
    %v688 = vunpack.c.l.b16 %v649
    %v689 = vunpack.c.l.b16 %v650
    %v690 = vunpack.c.l.b16 %v651
    %v691 = vunpack.c.l.b16 %v652
    %v692 = vunpack.c.l.b16 %v653
    %v693 = vunpack.c.l.b16 %v654
    %v694 = vunpack.c.l.b16 %v655
    %v695 = vunpack.c.l.b16 %v656
    %v696 = vunpack.c.l.b16 %v657
    %v697 = vunpack.c.l.b16 %v658
    %v698 = vunpack.c.l.b16 %v659
    %v699 = vunpack.c.l.b16 %v660
    %v700 = vpack.c.b16 %v685, %v684
    %v701 = vpack.c.b16 %v687, %v686
    %v702 = vpack.c.b16 %v689, %v688
    %v703 = vpack.c.b16 %v691, %v690
    %v704 = vpack.c.b16 %v693, %v692
    %v705 = vpack.c.b16 %v695, %v694
    %v706 = vpack.c.b16 %v697, %v696
    %v707 = vpack.c.b16 %v699, %v698
    %716 = vmatprep.subr.bf16.mxu0 0
    %717 = vmatpush1.bf16.msra.mxu0 %v700
    %718 = vmatprep.subr.bf16.mxu0 0
    %719 = vmatpush1.bf16.msra.mxu0 %v701
    %720 = vmatprep.subr.bf16.mxu0 0
    %721 = vmatpush1.bf16.msra.mxu0 %v702
    %722 = vmatprep.subr.bf16.mxu0 0
    %723 = vmatpush1.bf16.msra.mxu0 %v703
    %724 = vmatprep.subr.bf16.mxu0 0
    %725 = vmatpush1.bf16.msra.mxu0 %v704
    %726 = vmatprep.subr.bf16.mxu0 0
    %727 = vmatpush1.bf16.msra.mxu0 %v705
    %728 = vmatprep.subr.bf16.mxu0 0
    %729 = vmatpush1.bf16.msra.mxu0 %v706
    %730 = vmatprep.subr.bf16.mxu0 0
    %731 = vmatpush1.bf16.msra.mxu0 %v707
    %732 = vmatprep.subr.bf16.mxu0 0
    %733 = vmatpush1.bf16.msra.mxu0 0
    %734 = vmatprep.subr.bf16.mxu0 0
    %735 = vmatpush1.bf16.msra.mxu0 0
    %736 = vmatprep.subr.bf16.mxu0 0
    %737 = vmatpush1.bf16.msra.mxu0 0
    %738 = vmatprep.subr.bf16.mxu0 0
    %739 = vmatpush1.bf16.msra.mxu0 0
    %740 = vmatprep.subr.bf16.mxu0 0
    %741 = vmatpush1.bf16.msra.mxu0 0
    %742 = vmatprep.subr.bf16.mxu0 0
    %743 = vmatpush1.bf16.msra.mxu0 0
    %744 = vmatprep.subr.bf16.mxu0 0
    %745 = vmatpush1.bf16.msra.mxu0 0
    %746 = vmatprep.subr.bf16.mxu0 0
    %747 = vmatpush1.bf16.msra.mxu0 0
    %748 = vmatprep.mubr.bf16.mxu0 0
    %749 = vmatmul.mubr.bf16.gmra.mrb[0].mxu0 %v641
    %v750 = vpop.f32.mrb[0].mxu0
    %v751 = vadd.f32 %v666, %v750
    %v752 = vpop.f32.mrb[0].mxu0
    %v753 = vpop.f32.mrb[0].mxu0
    %v754 = vadd.f32 %v666, %v753
    %v755 = vpop.f32.mrb[0].mxu0
    %756 = vmatprep.mubr.bf16.mxu0 0
    %757 = vmatmul.mubr.bf16.gmra.mrb[0].mxu0 %v642
    %v758 = vpop.f32.mrb[0].mxu0
    %v759 = vadd.f32 %v666, %v758
    %v760 = vpop.f32.mrb[0].mxu0
    %v761 = vpop.f32.mrb[0].mxu0
    %v762 = vadd.f32 %v666, %v761
    %v763 = vpop.f32.mrb[0].mxu0
    %764 = vmatprep.mubr.bf16.mxu0 0
    %765 = vmatmul.mubr.bf16.gmra.mrb[0].mxu0 %v643
    %v766 = vpop.f32.mrb[0].mxu0
    %v767 = vadd.f32 %v666, %v766
    %v768 = vpop.f32.mrb[0].mxu0
    %v769 = vpop.f32.mrb[0].mxu0
    %v770 = vadd.f32 %v666, %v769
    %v771 = vpop.f32.mrb[0].mxu0
    %772 = vmatprep.mubr.bf16.mxu0 0
    %773 = vmatmul.mubr.bf16.gmra.mrb[0].mxu0 %v644
    %v774 = vpop.f32.mrb[0].mxu0
    %v775 = vadd.f32 %v666, %v774
    %v776 = vpop.f32.mrb[0].mxu0
    %v777 = vpop.f32.mrb[0].mxu0
    %v778 = vadd.f32 %v666, %v777
    %v779 = vpop.f32.mrb[0].mxu0
    %780 = vdwg.mxu0
    %781 = vst [vmem:[#allocation9] sm:$0xff] %v751
    %782 = vst [vmem:[#allocation9 + $0x8] sm:$0xff] %v754
    %783 = vst [vmem:[#allocation9 + $0x10] sm:$0xff] %v759
    %784 = vst [vmem:[#allocation9 + $0x18] sm:$0xff] %v762
    %785 = vst [vmem:[#allocation9 + $0x20] sm:$0xff] %v767
    %786 = vst [vmem:[#allocation9 + $0x28] sm:$0xff] %v770
    %787 = vst [vmem:[#allocation9 + $0x30] sm:$0xff] %v775
    %788 = vst [vmem:[#allocation9 + $0x38] sm:$0xff] %v778
    // Predicated region
    $region30: #{tpu_custom_call.1} parent=1 // pred_check
      _
    $region31: #{tpu_custom_call.1} parent=1 // pred_check_branch
      %790 = sbr.rel (0) target = $region33
    $region32: #{tpu_custom_call.1} parent=1 // pred_region
      %s792 = ssub.s32 1024, 1024
      %793 = vsyncadd [#allocation5], %s792
      %s794 = sshll.u32 [#allocation9], 4
      %s795 = int_to_ptr.vmem [resolvable:$true] %s794
      %800 = dma.vmem_to_hbm [thread:$0]  %s795, 1024, %s4, [#allocation5], 128, 128, 8
    $region33: #{tpu_custom_call.1} parent=1 // pred_fallthru
      _
    // Predicated region
    $region34: #{tpu_custom_call.1} parent=1 // pred_check
      _
    $region35: #{tpu_custom_call.1} parent=1 // pred_check_branch
      %802 = sbr.rel (0) target = $region37
    $region36: #{tpu_custom_call.1} parent=1 // pred_region
      %803 = dma.done [#allocation5], 1024
    $region37: #{tpu_custom_call.1} parent=1 // pred_fallthru
      _
    %804 = vsyncpa [#allocation4], 1
    %805 = vsyncpa [#allocation7], 1
    %806 = vsyncpa [#allocation5], 1

</llo_original>
